<compile_context>
chip_gen: v5e
topology: v5e:2x2
jax: 0.10.0
libtpu: 0.0.40
codegen_flags: <defaults>
</compile_context>

<pallas_src>
import jax
import jax.numpy as jnp
from jax.experimental import pallas as pl
from jax.experimental.pallas import tpu as pltpu


def policy_net_kernel(x_ref, w1_ref, b1_ref, w2_ref, b2_ref, w3_ref, b3_ref,
                      out_ref):
    # x arrives f32; cast to the MXU compute dtype on the VPU (free under DMA).
    x = x_ref[...].astype(w1_ref.dtype)

    # fc1 + ReLU  (MXU in compute dtype, f32 accumulate)
    h1 = jnp.dot(x, w1_ref[...], preferred_element_type=jnp.float32)
    h1 = jnp.maximum(h1 + b1_ref[...], 0.0)

    # fc2 + ReLU
    h2 = jnp.dot(h1.astype(w2_ref.dtype), w2_ref[...],
                 preferred_element_type=jnp.float32)
    h2 = jnp.maximum(h2 + b2_ref[...], 0.0)

    # fc3 + softmax over the last (lane) dim
    logits = jnp.dot(h2.astype(w3_ref.dtype), w3_ref[...],
                     preferred_element_type=jnp.float32)
    logits = logits + b3_ref[...]
    m = jnp.max(logits, axis=-1, keepdims=True)
    e = jnp.exp(logits - m)
    denom = jnp.sum(e, axis=-1, keepdims=True)
    # Exact divide: these probabilities feed multinomial sampling / log-probs,
    # so rows must sum to 1 (approx reciprocal left ~1e-3 residual).
    out_ref[...] = (e / denom).astype(out_ref.dtype)


def _round_up(x, m):
    return (x + m - 1) // m * m


def prepare_params(w1, b1, w2, b2, w3, b3, *, compute_dtype=jnp.bfloat16):
    """One-time lane-pad + compute-dtype cast of the weights (hoisted out of
    the per-call forward path). Biases stay f32 (NEG_PAD representability +
    f32 epilogue)."""
    in_size, hidden = w1.shape
    out_size = w3.shape[1]
    Hp = _round_up(hidden, 128)
    Np = _round_up(out_size, 128)
    # NOTE(v6e/v7x): if hidden/output ever scale into genuinely MXU-bound
    # territory, pad Hp/Np to multiples of 256 (2x256x256 MXU). At these toy
    # dims that would only waste FLOPs/HBM.
    NEG_PAD = -1e30  # padded output lanes -> exp underflows to 0 in softmax

    w1p = jnp.pad(w1, ((0, 0), (0, Hp - hidden))).astype(compute_dtype)
    b1p = jnp.pad(b1, ((0, 0), (0, Hp - hidden)))
    w2p = jnp.pad(w2, ((0, Hp - hidden), (0, Hp - hidden))).astype(compute_dtype)
    b2p = jnp.pad(b2, ((0, 0), (0, Hp - hidden)))
    w3p = jnp.pad(w3, ((0, Hp - hidden), (0, Np - out_size))).astype(compute_dtype)
    b3p = jnp.pad(b3, ((0, 0), (0, Np - out_size)), constant_values=NEG_PAD)
    return w1p, b1p, w2p, b2p, w3p, b3p


def policy_network_forward(x, w1, b1, w2, b2, w3, b3, *, out_size=None,
                           batch_tile=512, out_dtype=jnp.bfloat16):
    """x: [B, input_size] f32; padded weights from prepare_params.
    Returns [B, out_size] probabilities in out_dtype."""
    B, in_size = x.shape
    Hp = w1.shape[1]
    Np = w3.shape[1]
    if out_size is None:
        out_size = Np

    # bf16 vregs pack 16 sublanes -> round batch tiles to 16 for packed dtypes.
    sub = 16 if jnp.dtype(w1.dtype).itemsize < 4 else 8
    # Aim for >=2 grid steps (v7x has 2 TensorCores) while capping at batch_tile.
    target = max(sub, _round_up(pl.cdiv(B, 2), sub))
    TB = min(_round_up(batch_tile, sub), target)
    Bp = _round_up(B, TB)

    # Only the batch dim is padded; x keeps its true lane width and f32 dtype
    # (Mosaic pads K internally in VMEM; the kernel casts to compute dtype).
    xp = jnp.pad(x, ((0, Bp - B), (0, 0))) if Bp != B else x

    tiled = lambda shape: pl.BlockSpec(shape, lambda i: (i, 0))   # batch-tiled
    whole = lambda shape: pl.BlockSpec(shape, lambda i: (0, 0))   # VMEM-resident

    # Explicit VMEM guard (v7x physical VMEM is 64 MiB; default scoped 32 MiB).
    cd = jnp.dtype(w1.dtype).itemsize
    od = jnp.dtype(out_dtype).itemsize
    vmem_est = (2 * (TB * in_size * x.dtype.itemsize + TB * Np * od)      # dbl-buffered x/out
                + 2 * ((in_size * Hp + Hp * Hp + Hp * Np) * cd
                       + (2 * Hp + Np) * 4))                              # weights + f32 biases
    vmem_limit = int(min(max(2 * vmem_est, 4 << 20), 32 << 20))

    probs_padded = pl.pallas_call(
        policy_net_kernel,
        out_shape=jax.ShapeDtypeStruct((Bp, Np), out_dtype),
        grid=(Bp // TB,),
        in_specs=[
            tiled((TB, in_size)),
            whole((in_size, Hp)), whole((1, Hp)),
            whole((Hp, Hp)), whole((1, Hp)),
            whole((Hp, Np)), whole((1, Np)),
        ],
        out_specs=tiled((TB, Np)),
        compiler_params=pltpu.CompilerParams(
            dimension_semantics=("parallel",),
            vmem_limit_bytes=vmem_limit,
        ),
    )(xp, w1, b1, w2, b2, w3, b3)

    return probs_padded[:B, :out_size]


def init_params(key, input_size, hidden_size, output_size):
    """Deterministic init mimicking nn.Linear's uniform(-1/sqrt(fan_in), +)."""
    ks = jax.random.split(key, 6)

    def linear(kw, kb, fan_in, fan_out):
        bound = 1.0 / jnp.sqrt(jnp.float32(fan_in))
        w = jax.random.uniform(kw, (fan_in, fan_out), jnp.float32, -bound, bound)
        b = jax.random.uniform(kb, (1, fan_out), jnp.float32, -bound, bound)
        return w, b

    w1, b1 = linear(ks[0], ks[1], input_size, hidden_size)
    w2, b2 = linear(ks[2], ks[3], hidden_size, hidden_size)
    w3, b3 = linear(ks[4], ks[5], hidden_size, output_size)
    return w1, b1, w2, b2, w3, b3


def _jax_reference(x, params):
    w1, b1, w2, b2, w3, b3 = params
    h = jnp.maximum(x @ w1 + b1, 0.0)
    h = jnp.maximum(h @ w2 + b2, 0.0)
    return jax.nn.softmax(h @ w3 + b3, axis=-1)


if __name__ == "__main__":
    input_size, hidden_size, output_size = 16, 32, 8
    batch = 8

    key = jax.random.PRNGKey(0)
    k_x, k_p, k_x2 = jax.random.split(key, 3)
    x = jax.random.normal(k_x, (batch, input_size), jnp.float32)
    params = init_params(k_p, input_size, hidden_size, output_size)

    # Pad/cast the weights once (not per forward call).
    pparams = prepare_params(*params)

    fwd = jax.jit(policy_network_forward,
                  static_argnames=("out_size", "batch_tile", "out_dtype"))

    # --- small batch: correctness vs. plain-JAX f32 reference ---
    probs = jax.block_until_ready(fwd(x, *pparams, out_size=output_size))
    ref = _jax_reference(x, params)
    assert probs.shape == (batch, output_size)
    p32 = probs.astype(jnp.float32)
    assert jnp.allclose(jnp.sum(p32, axis=-1), 1.0, atol=2e-2)
    assert jnp.allclose(p32, ref, atol=3e-2)

    # --- larger, non-tile-multiple batch: exercises the multi-step pipelined grid ---
    x2 = jax.random.normal(k_x2, (300, input_size), jnp.float32)
    probs2 = jax.block_until_ready(fwd(x2, *pparams, out_size=output_size))
    ref2 = _jax_reference(x2, params)
    assert probs2.shape == (300, output_size)
    p232 = probs2.astype(jnp.float32)
    assert jnp.allclose(jnp.sum(p232, axis=-1), 1.0, atol=2e-2)
    assert jnp.allclose(p232, ref2, atol=3e-2)

    # TODO(synk): get_action's multinomial sampling is host/XLA-side RNG, not
    # part of the fused forward kernel.
    print("KERNEL_OK")
</pallas_src>

<mosaic_0001>
module attributes {stable_mosaic.version = 11 : i64} {
  func.func @policy_net_kernel(%arg0: i32, %arg1: memref<16x16xf32, #tpu.memory_space<vmem>>, %arg2: memref<16x128xbf16, #tpu.memory_space<vmem>>, %arg3: memref<1x128xf32, #tpu.memory_space<vmem>>, %arg4: memref<128x128xbf16, #tpu.memory_space<vmem>>, %arg5: memref<1x128xf32, #tpu.memory_space<vmem>>, %arg6: memref<128x128xbf16, #tpu.memory_space<vmem>>, %arg7: memref<1x128xf32, #tpu.memory_space<vmem>>, %arg8: memref<16x128xbf16, #tpu.memory_space<vmem>>) attributes {dimension_semantics = [#tpu.dimension_semantics<parallel>], iteration_bounds = array<i64: 1>, scalar_prefetch = 0 : i64, scratch_operands = 0 : i64, tpu.core_type = #tpu.core_type<tc>, window_params = [{transform_indices = @transform_0, window_bounds = array<i64: 16, 16>}, {pipeline_mode = #tpu.pipeline_mode<synchronous>, transform_indices = @transform_1, window_bounds = array<i64: 16, 128>}, {pipeline_mode = #tpu.pipeline_mode<synchronous>, transform_indices = @transform_2, window_bounds = array<i64: 1, 128>}, {pipeline_mode = #tpu.pipeline_mode<synchronous>, transform_indices = @transform_3, window_bounds = array<i64: 128, 128>}, {pipeline_mode = #tpu.pipeline_mode<synchronous>, transform_indices = @transform_4, window_bounds = array<i64: 1, 128>}, {pipeline_mode = #tpu.pipeline_mode<synchronous>, transform_indices = @transform_5, window_bounds = array<i64: 128, 128>}, {pipeline_mode = #tpu.pipeline_mode<synchronous>, transform_indices = @transform_6, window_bounds = array<i64: 1, 128>}, {transform_indices = @transform_7, window_bounds = array<i64: 16, 128>}]} {
    %c0 = arith.constant 0 : index
    %c0_0 = arith.constant 0 : index
    %0 = vector.load %arg1[%c0, %c0_0] : memref<16x16xf32, #tpu.memory_space<vmem>>, vector<16x16xf32>
    %1 = arith.truncf %0 : vector<16x16xf32> to vector<16x16xbf16>
    %c0_1 = arith.constant 0 : index
    %c0_2 = arith.constant 0 : index
    %2 = vector.load %arg2[%c0_1, %c0_2] : memref<16x128xbf16, #tpu.memory_space<vmem>>, vector<16x128xbf16>
    %cst = arith.constant dense<0.000000e+00> : vector<16x128xf32>
    %3 = tpu.matmul %1, %2, %cst {dimension_numbers = #tpu.dot_dimension_numbers<[1], [0], [0], [1], [0, 0, 1, 1], [], []>} : vector<16x16xbf16>, vector<16x128xbf16>, vector<16x128xf32> -> vector<16x128xf32>
    %c0_3 = arith.constant 0 : index
    %c0_4 = arith.constant 0 : index
    %4 = vector.load %arg3[%c0_3, %c0_4] : memref<1x128xf32, #tpu.memory_space<vmem>>, vector<1x128xf32>
    %5 = vector.broadcast %4 : vector<1x128xf32> to vector<16x128xf32>
    %6 = arith.addf %3, %5 : vector<16x128xf32>
    %cst_5 = arith.constant 0.000000e+00 : f32
    %7 = vector.broadcast %cst_5 : f32 to vector<16x128xf32>
    %8 = arith.maximumf %6, %7 : vector<16x128xf32>
    %9 = arith.truncf %8 : vector<16x128xf32> to vector<16x128xbf16>
    %c0_6 = arith.constant 0 : index
    %c0_7 = arith.constant 0 : index
    %10 = vector.load %arg4[%c0_6, %c0_7] : memref<128x128xbf16, #tpu.memory_space<vmem>>, vector<128x128xbf16>
    %cst_8 = arith.constant dense<0.000000e+00> : vector<16x128xf32>
    %11 = tpu.matmul %9, %10, %cst_8 {dimension_numbers = #tpu.dot_dimension_numbers<[1], [0], [0], [1], [0, 0, 1, 1], [], []>} : vector<16x128xbf16>, vector<128x128xbf16>, vector<16x128xf32> -> vector<16x128xf32>
    %c0_9 = arith.constant 0 : index
    %c0_10 = arith.constant 0 : index
    %12 = vector.load %arg5[%c0_9, %c0_10] : memref<1x128xf32, #tpu.memory_space<vmem>>, vector<1x128xf32>
    %13 = vector.broadcast %12 : vector<1x128xf32> to vector<16x128xf32>
    %14 = arith.addf %11, %13 : vector<16x128xf32>
    %cst_11 = arith.constant 0.000000e+00 : f32
    %15 = vector.broadcast %cst_11 : f32 to vector<16x128xf32>
    %16 = arith.maximumf %14, %15 : vector<16x128xf32>
    %17 = arith.truncf %16 : vector<16x128xf32> to vector<16x128xbf16>
    %c0_12 = arith.constant 0 : index
    %c0_13 = arith.constant 0 : index
    %18 = vector.load %arg6[%c0_12, %c0_13] : memref<128x128xbf16, #tpu.memory_space<vmem>>, vector<128x128xbf16>
    %cst_14 = arith.constant dense<0.000000e+00> : vector<16x128xf32>
    %19 = tpu.matmul %17, %18, %cst_14 {dimension_numbers = #tpu.dot_dimension_numbers<[1], [0], [0], [1], [0, 0, 1, 1], [], []>} : vector<16x128xbf16>, vector<128x128xbf16>, vector<16x128xf32> -> vector<16x128xf32>
    %c0_15 = arith.constant 0 : index
    %c0_16 = arith.constant 0 : index
    %20 = vector.load %arg7[%c0_15, %c0_16] : memref<1x128xf32, #tpu.memory_space<vmem>>, vector<1x128xf32>
    %21 = vector.broadcast %20 : vector<1x128xf32> to vector<16x128xf32>
    %22 = arith.addf %19, %21 : vector<16x128xf32>
    %cst_17 = arith.constant dense<0xFF800000> : vector<16xf32>
    %23 = vector.multi_reduction <maximumf>, %22, %cst_17 [1] : vector<16x128xf32> to vector<16xf32>
    %24 = vector.shape_cast %23 : vector<16xf32> to vector<16x1xf32>
    %25 = vector.broadcast %24 : vector<16x1xf32> to vector<16x128xf32>
    %26 = arith.subf %22, %25 : vector<16x128xf32>
    %27 = math.exp %26 : vector<16x128xf32>
    %cst_18 = arith.constant dense<0.000000e+00> : vector<16xf32>
    %28 = vector.multi_reduction <add>, %27, %cst_18 [1] : vector<16x128xf32> to vector<16xf32>
    %29 = vector.shape_cast %28 : vector<16xf32> to vector<16x1xf32>
    %30 = vector.broadcast %29 : vector<16x1xf32> to vector<16x128xf32>
    %31 = arith.divf %27, %30 : vector<16x128xf32>
    %32 = arith.truncf %31 : vector<16x128xf32> to vector<16x128xbf16>
    %c0_19 = arith.constant 0 : index
    %c0_20 = arith.constant 0 : index
    %33 = vector.load %arg8[%c0_19, %c0_20] : memref<16x128xbf16, #tpu.memory_space<vmem>>, vector<16x128xbf16>
    tpu.vector_store %arg8[%c0_19, %c0_20], %32 {strides = array<i32>} : memref<16x128xbf16, #tpu.memory_space<vmem>>, vector<16x128xbf16>,
    return
  }
  func.func @transform_0(%arg0: i32) -> (i32, i32) {
    %c0_i32 = arith.constant 0 : i32
    %c0_i32_0 = arith.constant 0 : i32
    return %arg0, %c0_i32 : i32, i32
  }
  func.func @transform_1(%arg0: i32) -> (i32, i32) {
    %c0_i32 = arith.constant 0 : i32
    %c0_i32_0 = arith.constant 0 : i32
    %c0_i32_1 = arith.constant 0 : i32
    return %c0_i32, %c0_i32_0 : i32, i32
  }
  func.func @transform_2(%arg0: i32) -> (i32, i32) {
    %c0_i32 = arith.constant 0 : i32
    %c0_i32_0 = arith.constant 0 : i32
    %c0_i32_1 = arith.constant 0 : i32
    return %c0_i32, %c0_i32_0 : i32, i32
  }
  func.func @transform_3(%arg0: i32) -> (i32, i32) {
    %c0_i32 = arith.constant 0 : i32
    %c0_i32_0 = arith.constant 0 : i32
    %c0_i32_1 = arith.constant 0 : i32
    return %c0_i32, %c0_i32_0 : i32, i32
  }
  func.func @transform_4(%arg0: i32) -> (i32, i32) {
    %c0_i32 = arith.constant 0 : i32
    %c0_i32_0 = arith.constant 0 : i32
    %c0_i32_1 = arith.constant 0 : i32
    return %c0_i32, %c0_i32_0 : i32, i32
  }
  func.func @transform_5(%arg0: i32) -> (i32, i32) {
    %c0_i32 = arith.constant 0 : i32
    %c0_i32_0 = arith.constant 0 : i32
    %c0_i32_1 = arith.constant 0 : i32
    return %c0_i32, %c0_i32_0 : i32, i32
  }
  func.func @transform_6(%arg0: i32) -> (i32, i32) {
    %c0_i32 = arith.constant 0 : i32
    %c0_i32_0 = arith.constant 0 : i32
    %c0_i32_1 = arith.constant 0 : i32
    return %c0_i32, %c0_i32_0 : i32, i32
  }
  func.func @transform_7(%arg0: i32) -> (i32, i32) {
    %c0_i32 = arith.constant 0 : i32
    %c0_i32_0 = arith.constant 0 : i32
    return %arg0, %c0_i32 : i32, i32
  }
}

</mosaic_0001>

<llo_original>
// kernel: policy_network_forward.1
$region0: #{policy_network_forward.1}
  #allocation0 [shape = 'u32[]', space=smem, size = 0x4, offset = 0x4, fixed_abs, tag = 'smem constant byte address 0x4 - core index']
  #allocation1 [shape = 'u32[72,128]{1,0:T(1,128)}', space=vmem, size = 0x9000, scoped, tag = 'internal scratch']
  %s0 = inlined_call_operand.vmem [shape: f32[16,16], index: 0, kind: input, shape index: {}]
  %s1 = inlined_call_operand.vmem [shape: bf16[16,128], index: 1, kind: input, shape index: {}]
  %s2 = inlined_call_operand.vmem [shape: f32[1,128], index: 2, kind: input, shape index: {}]
  %s3 = inlined_call_operand.hbm [shape: bf16[128,128], index: 3, kind: input, shape index: {}]
  %s4 = inlined_call_operand.vmem [shape: f32[1,128], index: 4, kind: input, shape index: {}]
  %s5 = inlined_call_operand.hbm [shape: bf16[128,128], index: 5, kind: input, shape index: {}]
  %s6 = inlined_call_operand.vmem [shape: f32[1,128], index: 6, kind: input, shape index: {}]
  %s7 = inlined_call_operand.vmem [shape: bf16[16,128], index: 7, kind: output, shape index: {}]
  %s8 = sld [smem:[#allocation0]]
  $region46: #{policy_network_forward.1} parent=0
    _
  %s10 = ssub.s32 1, %s8
  %s11 = scalar_select 0, %s10, %s8
  $region1: #{policy_network_forward.1} parent=0
    #allocation2 [shape = 'u8[32768]{0}', space=vmem, size = 0x8000, scoped, tag = 'input window, operand 3, single buffered']
    #allocation3 [shape = 's32[1]{0}', space=sflag, size = 0x4, scoped, tag = 'scoped memory for policy_network_forward.1']
    #allocation4 [shape = 'u8[32768]{0}', space=vmem, size = 0x8000, scoped, tag = 'input window, operand 5, single buffered']
    #allocation5 [shape = 's32[1]{0}', space=sflag, size = 0x4, scoped, tag = 'scoped memory for policy_network_forward.1']
    %12 = vsyncpa [#allocation3], 0
    %13 = vsyncpa [#allocation5], 0
    // Predicated region
    $region2: #{policy_network_forward.1} parent=1 // pred_check
      _
    $region3: #{policy_network_forward.1} parent=1 // pred_check_branch
      %15 = sbr.rel (0) target = $region5
    $region4: #{policy_network_forward.1} parent=1 // pred_region
      _
    $region5: #{policy_network_forward.1} parent=1 // pred_fallthru
      _
    // Predicated region
    $region6: #{policy_network_forward.1} parent=1 // pred_check
      _
    $region7: #{policy_network_forward.1} parent=1 // pred_check_branch
      %17 = sbr.rel (0) target = $region9
    $region8: #{policy_network_forward.1} parent=1 // pred_region
      _
    $region9: #{policy_network_forward.1} parent=1 // pred_fallthru
      _
    // Predicated region
    $region10: #{policy_network_forward.1} parent=1 // pred_check
      _
    $region11: #{policy_network_forward.1} parent=1 // pred_check_branch
      %19 = sbr.rel (0) target = $region13
    $region12: #{policy_network_forward.1} parent=1 // pred_region
      _
    $region13: #{policy_network_forward.1} parent=1 // pred_fallthru
      _
    // Predicated region
    $region14: #{policy_network_forward.1} parent=1 // pred_check
      _
    $region15: #{policy_network_forward.1} parent=1 // pred_check_branch
      %21 = sbr.rel (0) target = $region17
    $region16: #{policy_network_forward.1} parent=1 // pred_region
      %23 = vsyncadd [#allocation3], 0
      %s24 = sshll.u32 %s3, 4
      %s25 = int_to_ptr.hbm [resolvable:$true] %s24
      %s26 = sshll.u32 [#allocation2], 4
      %s27 = int_to_ptr.vmem [resolvable:$true] %s26
      %32 = dma.hbm_to_vmem [thread:$0]  %s25, 1024, %s27, [#allocation3], 64, 64, 4
    $region17: #{policy_network_forward.1} parent=1 // pred_fallthru
      _
    // Predicated region
    $region18: #{policy_network_forward.1} parent=1 // pred_check
      _
    $region19: #{policy_network_forward.1} parent=1 // pred_check_branch
      %34 = sbr.rel (0) target = $region21
    $region20: #{policy_network_forward.1} parent=1 // pred_region
      _
    $region21: #{policy_network_forward.1} parent=1 // pred_fallthru
      _
    // Predicated region
    $region22: #{policy_network_forward.1} parent=1 // pred_check
      _
    $region23: #{policy_network_forward.1} parent=1 // pred_check_branch
      %36 = sbr.rel (0) target = $region25
    $region24: #{policy_network_forward.1} parent=1 // pred_region
      %38 = vsyncadd [#allocation5], 0
      %s39 = sshll.u32 %s5, 4
      %s40 = int_to_ptr.hbm [resolvable:$true] %s39
      %s41 = sshll.u32 [#allocation4], 4
      %s42 = int_to_ptr.vmem [resolvable:$true] %s41
      %47 = dma.hbm_to_vmem [thread:$0]  %s40, 1024, %s42, [#allocation5], 64, 64, 4
    $region25: #{policy_network_forward.1} parent=1 // pred_fallthru
      _
    // Predicated region
    $region26: #{policy_network_forward.1} parent=1 // pred_check
      _
    $region27: #{policy_network_forward.1} parent=1 // pred_check_branch
      %49 = sbr.rel (0) target = $region29
    $region28: #{policy_network_forward.1} parent=1 // pred_region
      _
    $region29: #{policy_network_forward.1} parent=1 // pred_fallthru
      _
    // Predicated region
    $region30: #{policy_network_forward.1} parent=1 // pred_check
      _
    $region31: #{policy_network_forward.1} parent=1 // pred_check_branch
      %51 = sbr.rel (0) target = $region33
    $region32: #{policy_network_forward.1} parent=1 // pred_region
      %53 = dma.done [#allocation3], 1024
    $region33: #{policy_network_forward.1} parent=1 // pred_fallthru
      _
    // Predicated region
    $region34: #{policy_network_forward.1} parent=1 // pred_check
      _
    $region35: #{policy_network_forward.1} parent=1 // pred_check_branch
      %55 = sbr.rel (0) target = $region37
    $region36: #{policy_network_forward.1} parent=1 // pred_region
      %57 = dma.done [#allocation5], 1024
    $region37: #{policy_network_forward.1} parent=1 // pred_fallthru
      _
    %v59 = vld [vmem:[%s0] sm:$0xff]
    %v60 = vld [vmem:[%s0 + $0x8] sm:$0xff]
    %v61 = vpack.c.bf16 %v60, %v59
    %v62 = vld [vmem:[%s1] sm:$0xf]
    %v63 = vld [vmem:[%s1 + $0x4] sm:$0xf]
    %v64 = vld [vmem:[%s2] sm:$0x1]
    %v66 = vperm.slane %v64, 0
    %v70 = vunpack.c.l.b16 %v62
    %v71 = vunpack.c.l.b16 %v63
    %v72 = vpack.c.b16 %v71, %v70
    %vm74 = vcmask 130048
    %v76 = vsel %vm74, %v61, 0
    %78 = vmatpush.bf16.msra.mxu0 0
    %79 = vmatpush.bf16.msra.mxu0 0
    %80 = vmatpush.bf16.msra.mxu0 0
    %81 = vmatpush.bf16.msra.mxu0 0
    %82 = vmatpush.bf16.msra.mxu0 0
    %83 = vmatpush.bf16.msra.mxu0 0
    %84 = vmatpush.bf16.msra.mxu0 0
    %85 = vmatpush.bf16.msra.mxu0 %v72
    %86 = vmatmul.bf16.gmra.mxu0 %v76
    %v87 = vpop.f32.mrf.mxu0
    %v88 = vadd.f32 %v66, %v87
    %v89 = vpop.f32.mrf.mxu0
    %v90 = vadd.f32 %v66, %v89
    %91 = vdwg.mxu0
    %v92 = vmax.f32 %v88, 0.0
    %v93 = vmax.f32 %v90, 0.0
    %v94 = vpack.c.bf16 %v93, %v92
    %v95 = vld [vmem:[#allocation2] sm:$0xf]
    %v96 = vld [vmem:[#allocation2 + $0x4] sm:$0xf]
    %v97 = vld [vmem:[#allocation2 + $0x8] sm:$0xf]
    %v98 = vld [vmem:[#allocation2 + $0xc] sm:$0xf]
    %v99 = vld [vmem:[#allocation2 + $0x10] sm:$0xf]
    %v100 = vld [vmem:[#allocation2 + $0x14] sm:$0xf]
    %v101 = vld [vmem:[#allocation2 + $0x18] sm:$0xf]
    %v102 = vld [vmem:[#allocation2 + $0x1c] sm:$0xf]
    %v103 = vld [vmem:[#allocation2 + $0x20] sm:$0xf]
    %v104 = vld [vmem:[#allocation2 + $0x24] sm:$0xf]
    %v105 = vld [vmem:[#allocation2 + $0x28] sm:$0xf]
    %v106 = vld [vmem:[#allocation2 + $0x2c] sm:$0xf]
    %v107 = vld [vmem:[#allocation2 + $0x30] sm:$0xf]
    %v108 = vld [vmem:[#allocation2 + $0x34] sm:$0xf]
    %v109 = vld [vmem:[#allocation2 + $0x38] sm:$0xf]
    %v110 = vld [vmem:[#allocation2 + $0x3c] sm:$0xf]
    %v111 = vld [vmem:[%s4] sm:$0x1]
    %v113 = vperm.slane %v111, 0
    %v131 = vunpack.c.l.b16 %v95
    %v132 = vunpack.c.l.b16 %v96
    %v133 = vunpack.c.l.b16 %v97
    %v134 = vunpack.c.l.b16 %v98
    %v135 = vunpack.c.l.b16 %v99
    %v136 = vunpack.c.l.b16 %v100
    %v137 = vunpack.c.l.b16 %v101
    %v138 = vunpack.c.l.b16 %v102
    %v139 = vunpack.c.l.b16 %v103
    %v140 = vunpack.c.l.b16 %v104
    %v141 = vunpack.c.l.b16 %v105
    %v142 = vunpack.c.l.b16 %v106
    %v143 = vunpack.c.l.b16 %v107
    %v144 = vunpack.c.l.b16 %v108
    %v145 = vunpack.c.l.b16 %v109
    %v146 = vunpack.c.l.b16 %v110
    %v147 = vpack.c.b16 %v132, %v131
    %v148 = vpack.c.b16 %v134, %v133
    %v149 = vpack.c.b16 %v136, %v135
    %v150 = vpack.c.b16 %v138, %v137
    %v151 = vpack.c.b16 %v140, %v139
    %v152 = vpack.c.b16 %v142, %v141
    %v153 = vpack.c.b16 %v144, %v143
    %v154 = vpack.c.b16 %v146, %v145
    %163 = vmatpush.bf16.msra.mxu0 %v154
    %164 = vmatpush.bf16.msra.mxu0 %v153
    %165 = vmatpush.bf16.msra.mxu0 %v152
    %166 = vmatpush.bf16.msra.mxu0 %v151
    %167 = vmatpush.bf16.msra.mxu0 %v150
    %168 = vmatpush.bf16.msra.mxu0 %v149
    %169 = vmatpush.bf16.msra.mxu0 %v148
    %170 = vmatpush.bf16.msra.mxu0 %v147
    %171 = vmatmul.bf16.gmra.mxu0 %v94
    %v172 = vpop.f32.mrf.mxu0
    %v173 = vadd.f32 %v113, %v172
    %v174 = vpop.f32.mrf.mxu0
    %v175 = vadd.f32 %v113, %v174
    %176 = vdwg.mxu0
    %v177 = vmax.f32 %v173, 0.0
    %v178 = vmax.f32 %v175, 0.0
    %v179 = vpack.c.bf16 %v178, %v177
    %v180 = vld [vmem:[#allocation4] sm:$0xf]
    %v181 = vld [vmem:[#allocation4 + $0x4] sm:$0xf]
    %v182 = vld [vmem:[#allocation4 + $0x8] sm:$0xf]
    %v183 = vld [vmem:[#allocation4 + $0xc] sm:$0xf]
    %v184 = vld [vmem:[#allocation4 + $0x10] sm:$0xf]
    %v185 = vld [vmem:[#allocation4 + $0x14] sm:$0xf]
    %v186 = vld [vmem:[#allocation4 + $0x18] sm:$0xf]
    %v187 = vld [vmem:[#allocation4 + $0x1c] sm:$0xf]
    %v188 = vld [vmem:[#allocation4 + $0x20] sm:$0xf]
    %v189 = vld [vmem:[#allocation4 + $0x24] sm:$0xf]
    %v190 = vld [vmem:[#allocation4 + $0x28] sm:$0xf]
    %v191 = vld [vmem:[#allocation4 + $0x2c] sm:$0xf]
    %v192 = vld [vmem:[#allocation4 + $0x30] sm:$0xf]
    %v193 = vld [vmem:[#allocation4 + $0x34] sm:$0xf]
    %v194 = vld [vmem:[#allocation4 + $0x38] sm:$0xf]
    %v195 = vld [vmem:[#allocation4 + $0x3c] sm:$0xf]
    %v196 = vld [vmem:[%s6] sm:$0x1]
    %v198 = vperm.slane %v196, 0
    %v216 = vunpack.c.l.b16 %v180
    %v217 = vunpack.c.l.b16 %v181
    %v218 = vunpack.c.l.b16 %v182
    %v219 = vunpack.c.l.b16 %v183
    %v220 = vunpack.c.l.b16 %v184
    %v221 = vunpack.c.l.b16 %v185
    %v222 = vunpack.c.l.b16 %v186
    %v223 = vunpack.c.l.b16 %v187
    %v224 = vunpack.c.l.b16 %v188
    %v225 = vunpack.c.l.b16 %v189
    %v226 = vunpack.c.l.b16 %v190
    %v227 = vunpack.c.l.b16 %v191
    %v228 = vunpack.c.l.b16 %v192
    %v229 = vunpack.c.l.b16 %v193
    %v230 = vunpack.c.l.b16 %v194
    %v231 = vunpack.c.l.b16 %v195
    %v232 = vpack.c.b16 %v217, %v216
    %v233 = vpack.c.b16 %v219, %v218
    %v234 = vpack.c.b16 %v221, %v220
    %v235 = vpack.c.b16 %v223, %v222
    %v236 = vpack.c.b16 %v225, %v224
    %v237 = vpack.c.b16 %v227, %v226
    %v238 = vpack.c.b16 %v229, %v228
    %v239 = vpack.c.b16 %v231, %v230
    %248 = vmatpush.bf16.msra.mxu0 %v239
    %249 = vmatpush.bf16.msra.mxu0 %v238
    %250 = vmatpush.bf16.msra.mxu0 %v237
    %251 = vmatpush.bf16.msra.mxu0 %v236
    %252 = vmatpush.bf16.msra.mxu0 %v235
    %253 = vmatpush.bf16.msra.mxu0 %v234
    %254 = vmatpush.bf16.msra.mxu0 %v233
    %255 = vmatpush.bf16.msra.mxu0 %v232
    %256 = vmatmul.bf16.gmra.mxu0 %v179
    %v257 = vpop.f32.mrf.mxu0
    %v258 = vadd.f32 %v198, %v257
    %v259 = vpop.f32.mrf.mxu0
    %v260 = vadd.f32 %v198, %v259
    %261 = vdwg.mxu0
    %262 = vmax.xlane.f32.xlu0 %v258
    %v263 = vpop.xlane.xlu0 %262
    %264 = vmax.xlane.f32.xlu0 %v260
    %v265 = vpop.xlane.xlu0 %264
    %v266 = vsub.f32 %v258, %v263
    %v267 = vsub.f32 %v260, %v265
    %v268 = vmul.f32 %v266, 1.442695
    %v269 = vpow.pop %v268
    %v270 = vmul.f32 %v267, 1.442695
    %v271 = vpow.pop %v270
    %272 = vadd.xlane.f32.xlu0 %v269
    %v273 = vpop.xlane.xlu0 %272
    %274 = vadd.xlane.f32.xlu0 %v271
    %v275 = vpop.xlane.xlu0 %274
    %v276 = vrcp.pop %v273
    %v277 = vmul.f32 %v273, %v276
    %v278 = vsub.f32 1.0, %v277
    %v279 = vmul.f32 %v276, %v278
    %v280 = vadd.f32 %v276, %v279
    %vm281 = vweird.f32 %v273
    %vm282 = vweird.f32 %v276
    %vm283 = vmor %vm281, %vm282
    %v284 = vsel %vm283, %v276, %v280
    %v285 = vand.u32 2147483647, %v273
    %vm286 = vcmp.eq.f32.partialorder %v285, 8.507059e+37
    %v287 = vand.u32 %v273, 2147483648
    %v288 = vor.u32 1.1754944e-38, %v287
    %v289 = vsel %vm286, %v288, %v284
    %v290 = vmul.f32 %v269, %v289
    %v291 = vrcp.pop %v275
    %v292 = vmul.f32 %v275, %v291
    %v293 = vsub.f32 1.0, %v292
    %v294 = vmul.f32 %v291, %v293
    %v295 = vadd.f32 %v291, %v294
    %vm296 = vweird.f32 %v275
    %vm297 = vweird.f32 %v291
    %vm298 = vmor %vm296, %vm297
    %v299 = vsel %vm298, %v291, %v295
    %v300 = vand.u32 2147483647, %v275
    %vm301 = vcmp.eq.f32.partialorder %v300, 8.507059e+37
    %v302 = vand.u32 %v275, 2147483648
    %v303 = vor.u32 1.1754944e-38, %v302
    %v304 = vsel %vm301, %v303, %v299
    %v305 = vmul.f32 %v271, %v304
    %v306 = vpack.c.bf16 %v290, %v290
    %v307 = vpack.c.bf16 %v305, %v305
    %308 = vst [vmem:[%s7] sm:$0xf] %v306
    %309 = vst [vmem:[%s7 + $0x4] sm:$0xf] %v307
    // Predicated region
    $region38: #{policy_network_forward.1} parent=1 // pred_check
      _
    $region39: #{policy_network_forward.1} parent=1 // pred_check_branch
      %311 = sbr.rel (0) target = $region41
    $region40: #{policy_network_forward.1} parent=1 // pred_region
      _
    $region41: #{policy_network_forward.1} parent=1 // pred_fallthru
      _
    // Predicated region
    $region42: #{policy_network_forward.1} parent=1 // pred_check
      _
    $region43: #{policy_network_forward.1} parent=1 // pred_check_branch
      %313 = sbr.rel (0) target = $region45
    $region44: #{policy_network_forward.1} parent=1 // pred_region
      _
    $region45: #{policy_network_forward.1} parent=1 // pred_fallthru
      _
    %314 = vsyncpa [#allocation3], 1
    %315 = vsyncpa [#allocation5], 1

</llo_original>
